<compile_context>
chip_gen: v7x
topology: tpu7x:2x2x1
jax: 0.10.0
libtpu: 0.0.40
codegen_flags: <defaults>
</compile_context>

<pallas_src>
import functools
import itertools
import math

import numpy as np
import jax
import jax.numpy as jnp
from jax.experimental import pallas as pl
from jax.experimental.pallas import tpu as pltpu

BN_EPS = 1e-5
BN_FOLD_SCALE = 1.0 / math.sqrt(1.0 + BN_EPS)   # eval-mode BN (mean=0, var=1)
VMEM_LIMIT = 48 * 1024 * 1024


def _round_up(x, m):
    return (x + m - 1) // m * m


def _clamp(v, hi):
    return jnp.minimum(jnp.maximum(v, 0), hi)


# ----------------------------------------------------------------------------
# Pallas kernels
# ----------------------------------------------------------------------------
def _gemm_kernel(*refs, relu, mode, nseg, seg_bounds):
    """Multi-segment (split-K) M/N/K-tiled GEMM with fused scale/bias (+ReLU)
    and optional fused residual-add or mask (y*(1+m)) epilogue.

    grid = (M_tiles, N_tiles, K_tiles_total); the K axis spans all segments.
    Inactive segments keep a clamped (constant) block index, so Pallas does not
    re-DMA their blocks."""
    a_refs = refs[:nseg]
    w_refs = refs[nseg:2 * nseg]
    s_ref = refs[2 * nseg]
    c_ref = refs[2 * nseg + 1]
    idx = 2 * nseg + 2
    e_ref = None
    if mode in ('residual', 'mask'):
        e_ref = refs[idx]
        idx += 1
    o_ref, acc_ref = refs[idx], refs[idx + 1]

    k = pl.program_id(2)

    @pl.when(k == 0)
    def _():
        acc_ref[...] = jnp.zeros_like(acc_ref)

    if nseg == 1:
        acc_ref[...] += jnp.dot(a_refs[0][...], w_refs[0][...],
                                preferred_element_type=jnp.float32)
    else:
        for si in range(nseg):
            lo, hi = seg_bounds[si], seg_bounds[si + 1]

            @pl.when(jnp.logical_and(k >= lo, k < hi))
            def _(a_ref=a_refs[si], w_ref=w_refs[si]):
                acc_ref[...] += jnp.dot(a_ref[...], w_ref[...],
                                        preferred_element_type=jnp.float32)

    @pl.when(k == pl.num_programs(2) - 1)
    def _():
        y = acc_ref[...] * s_ref[...] + c_ref[...]
        if mode == 'residual':                    # conv -> BN -> (+res) -> ReLU
            y = y + e_ref[...].astype(jnp.float32)
        if relu:
            y = jnp.maximum(y, 0.0)
        if mode == 'mask':                        # conv -> BN -> ReLU -> *(1+m)
            y = y * (1.0 + e_ref[...].astype(jnp.float32))
        o_ref[...] = y.astype(o_ref.dtype)


def _dconv_kernel(*refs, nseg, seg_bounds, ksize, dil, Wp, relu):
    """Direct (im2col-free) stride-1 KxK conv, possibly over a channel-concat
    of several inputs (segments).

    Each x_ref holds the full flattened padded image (rows = Hp*Wp) for the
    current Cin tile; the k*k taps are statically row-shifted slices of it and
    are folded into the K reduction.  grid = (N, Cout_tiles, Cin_tiles_total).
    """
    x_refs = refs[:nseg]
    w_refs = refs[nseg:2 * nseg]
    s_ref, c_ref, o_ref, acc_ref = refs[2 * nseg:2 * nseg + 4]
    kk = pl.program_id(2)
    ms_p = acc_ref.shape[0]

    @pl.when(kk == 0)
    def _():
        acc_ref[...] = jnp.zeros_like(acc_ref)

    def taps_matmul(x_ref, w_ref):
        for t in range(ksize * ksize):
            i, j = divmod(t, ksize)
            off = (i * Wp + j) * dil
            acc_ref[...] += jnp.dot(x_ref[0, off:off + ms_p, :], w_ref[t],
                                    preferred_element_type=jnp.float32)

    if nseg == 1:
        taps_matmul(x_refs[0], w_refs[0])
    else:
        for si in range(nseg):
            lo, hi = seg_bounds[si], seg_bounds[si + 1]

            @pl.when(jnp.logical_and(kk >= lo, kk < hi))
            def _(x_ref=x_refs[si], w_ref=w_refs[si]):
                taps_matmul(x_ref, w_ref)

    @pl.when(kk == pl.num_programs(2) - 1)
    def _():
        y = acc_ref[...] * s_ref[...] + c_ref[...]
        if relu:
            y = jnp.maximum(y, 0.0)
        o_ref[...] = y.astype(o_ref.dtype)[None]


def _absdiff_kernel(a_ref, t_ref, o_ref):
    o_ref[...] = jnp.abs(a_ref[...].astype(jnp.float32)
                         - t_ref[...].astype(jnp.float32)).astype(o_ref.dtype)


def _maxk_kernel(*refs):
    o_ref = refs[-1]
    r = refs[0][...]
    for rf in refs[1:-1]:
        r = jnp.maximum(r, rf[...])
    o_ref[...] = r


def _gap_kernel(x_ref, o_ref, acc_ref, *, inv_count):
    @pl.when(pl.program_id(1) == 0)
    def _():
        acc_ref[...] = jnp.zeros_like(acc_ref)
    acc_ref[...] += jnp.sum(x_ref[0].astype(jnp.float32), axis=0, keepdims=True)

    @pl.when(pl.program_id(1) == pl.num_programs(1) - 1)
    def _():
        o_ref[...] = (acc_ref[...] * inv_count)[None]


# ----------------------------------------------------------------------------
# index-map helpers for segmented (split-K) operands
# ----------------------------------------------------------------------------
def _a_seg_idx(m, n, k, *, lo, nb):
    return (m, _clamp(k - lo, nb - 1))


def _w_seg_idx(m, n, k, *, lo, nb):
    return (_clamp(k - lo, nb - 1), n)


def _dconv_x_idx(n, j, c, *, lo, nb):
    return (n, 0, _clamp(c - lo, nb - 1))


def _dconv_w_idx(n, j, c, *, lo, nb):
    return (0, _clamp(c - lo, nb - 1), j)


# ----------------------------------------------------------------------------
# Pallas call wrappers
# ----------------------------------------------------------------------------
def pallas_matmul_epilogue(segments, scale, bias, relu, extra=None, mode='none',
                           out_dtype=jnp.bfloat16):
    """sum_s a_s:[M,K_s] @ w_s:[K_s,N] -> [M,N]  (bf16 MXU, f32 accumulation).

    Epilogue: y = acc*scale[N] + bias[N]; mode='residual' adds extra[M,N] before
    ReLU; mode='mask' multiplies by (1+extra[M,1]) after ReLU."""
    M = segments[0][0].shape[0]
    Ncols = segments[0][1].shape[1]
    nseg = len(segments)

    kp_list = [_round_up(a.shape[1], 128) for a, _ in segments]
    tk = 128
    for cand in (1024, 512, 256):
        if all(kp % cand == 0 for kp in kp_list):
            tk = cand
            break
    nkb = [kp // tk for kp in kp_list]
    seg_bounds = tuple(int(v) for v in np.cumsum([0] + nkb))
    total_kb = seg_bounds[-1]

    Np = _round_up(Ncols, 128)
    tn = 256 if (Np % 256 == 0 and Np >= 256) else 128
    tm = min(1024, _round_up(M, 16))
    Mp = _round_up(M, tm)
    if Np // tn == 1 and Mp // tm == 1 and Mp >= 32:
        # keep >= 2 blocks along a parallel axis (v7x has 2 TensorCores)
        Mp = _round_up(M, 32)
        tm = Mp // 2

    a_ps, w_ps = [], []
    for (a, w), kp in zip(segments, kp_list):
        ki = a.shape[1]
        a_ps.append(jnp.pad(a.astype(jnp.bfloat16), ((0, Mp - M), (0, kp - ki))))
        w_ps.append(jnp.pad(w.astype(jnp.bfloat16), ((0, kp - ki), (0, Np - Ncols))))
    s_p = jnp.pad(scale.astype(jnp.float32).reshape(1, Ncols),
                  ((0, 0), (0, Np - Ncols)))
    c_p = jnp.pad(bias.astype(jnp.float32).reshape(1, Ncols),
                  ((0, 0), (0, Np - Ncols)))

    in_specs = [pl.BlockSpec((tm, tk),
                             functools.partial(_a_seg_idx, lo=seg_bounds[s], nb=nkb[s]))
                for s in range(nseg)]
    in_specs += [pl.BlockSpec((tk, tn),
                              functools.partial(_w_seg_idx, lo=seg_bounds[s], nb=nkb[s]))
                 for s in range(nseg)]
    in_specs += [pl.BlockSpec((1, tn), lambda m, n, k: (0, n)),
                 pl.BlockSpec((1, tn), lambda m, n, k: (0, n))]
    args = a_ps + w_ps + [s_p, c_p]
    if mode == 'residual':
        e_p = jnp.pad(extra.astype(jnp.bfloat16), ((0, Mp - M), (0, Np - Ncols)))
        in_specs.append(pl.BlockSpec((tm, tn), lambda m, n, k: (m, n)))
        args.append(e_p)
    elif mode == 'mask':
        e_p = jnp.pad(extra.astype(jnp.float32), ((0, Mp - M), (0, 0)))
        in_specs.append(pl.BlockSpec((tm, 1), lambda m, n, k: (m, 0)))
        args.append(e_p)

    out = pl.pallas_call(
        functools.partial(_gemm_kernel, relu=relu, mode=mode,
                          nseg=nseg, seg_bounds=seg_bounds),
        out_shape=jax.ShapeDtypeStruct((Mp, Np), out_dtype),
        grid_spec=pltpu.PrefetchScalarGridSpec(
            num_scalar_prefetch=0,
            grid=(Mp // tm, Np // tn, total_kb),
            in_specs=in_specs,
            out_specs=pl.BlockSpec((tm, tn), lambda m, n, k: (m, n)),
            scratch_shapes=[pltpu.VMEM((tm, tn), jnp.float32)],
        ),
        compiler_params=pltpu.CompilerParams(
            dimension_semantics=("parallel", "parallel", "arbitrary"),
            vmem_limit_bytes=VMEM_LIMIT),
    )(*args)
    return out[:M, :Ncols]


def conv3x3_cat(xs, p, *, padding, dilation=1, relu=True):
    """Direct stride-1 KxK conv over the (virtual) channel-concat of `xs`
    (same spatial dims).  No im2col / concat is materialized in HBM."""
    ksize, cout = p['kh'], p['cout']
    d = dilation
    N, H, W, _ = xs[0].shape
    cins = [int(x.shape[-1]) for x in xs]
    assert sum(cins) == p['cin']

    OH = H + 2 * padding - d * (ksize - 1)
    OW = W + 2 * padding - d * (ksize - 1)
    Hp, Wp = H + 2 * padding, W + 2 * padding
    R = Hp * Wp
    Ms = OH * Wp                               # rows computed (incl. (k-1)*d garbage cols)
    Ms_p = _round_up(Ms, 16)
    max_off = (ksize - 1) * d * (Wp + 1)
    Rp = _round_up(max(R, max_off + Ms_p), 8)

    if len(xs) == 1 and cins[0] <= 256 and cins[0] % 8 == 0:
        cin_ps = [cins[0]]
        tkc = cins[0]
    else:
        cin_ps = [_round_up(c, 128) for c in cins]
        tkc = 256 if all(cp % 256 == 0 for cp in cin_ps) else 128
    nkb = [cp // tkc for cp in cin_ps]
    seg_bounds = tuple(int(v) for v in np.cumsum([0] + nkb))
    total_kb = seg_bounds[-1]

    Cout_p = _round_up(cout, 128)
    tnc = 256 if Cout_p % 256 == 0 else 128
    if N == 1 and Cout_p == tnc and Cout_p % 256 == 0:
        tnc //= 2                              # v7x: >=2 blocks on the parallel Cout axis

    # inputs: pad spatially (conv zero-pad), flatten rows, pad rows & channels
    x_ps = []
    for x, c, cp in zip(xs, cins, cin_ps):
        xpad = jnp.pad(x.astype(jnp.bfloat16),
                       ((0, 0), (padding, padding), (padding, padding), (0, 0)))
        xf = xpad.reshape(N, R, c)
        x_ps.append(jnp.pad(xf, ((0, 0), (0, Rp - R), (0, cp - c))))

    # weights: (k*k*cin_total, cout) -> per-segment (k*k, cin_s, cout), padded
    w3_full = p['wt'].reshape(ksize * ksize, p['cin'], cout)
    w_ps, off = [], 0
    for c, cp in zip(cins, cin_ps):
        wseg = w3_full[:, off:off + c, :]
        w_ps.append(jnp.pad(wseg, ((0, 0), (0, cp - c), (0, Cout_p - cout))))
        off += c
    s_p = jnp.pad(p['scale'], (0, Cout_p - cout)).reshape(1, Cout_p)
    c_p = jnp.pad(p['bias'], (0, Cout_p - cout)).reshape(1, Cout_p)

    nseg = len(xs)
    in_specs = [pl.BlockSpec((1, Rp, tkc),
                             functools.partial(_dconv_x_idx, lo=seg_bounds[s], nb=nkb[s]))
                for s in range(nseg)]
    in_specs += [pl.BlockSpec((ksize * ksize, tkc, tnc),
                              functools.partial(_dconv_w_idx, lo=seg_bounds[s], nb=nkb[s]))
                 for s in range(nseg)]
    in_specs += [pl.BlockSpec((1, tnc), lambda n, j, c: (0, j)),
                 pl.BlockSpec((1, tnc), lambda n, j, c: (0, j))]

    out = pl.pallas_call(
        functools.partial(_dconv_kernel, nseg=nseg, seg_bounds=seg_bounds,
                          ksize=ksize, dil=d, Wp=Wp, relu=relu),
        out_shape=jax.ShapeDtypeStruct((N, Ms_p, Cout_p), jnp.bfloat16),
        grid_spec=pltpu.PrefetchScalarGridSpec(
            num_scalar_prefetch=0,
            grid=(N, Cout_p // tnc, total_kb),
            in_specs=in_specs,
            out_specs=pl.BlockSpec((1, Ms_p, tnc), lambda n, j, c: (n, 0, j)),
            scratch_shapes=[pltpu.VMEM((Ms_p, tnc), jnp.float32)],
        ),
        compiler_params=pltpu.CompilerParams(
            dimension_semantics=("parallel", "parallel", "arbitrary"),
            vmem_limit_bytes=VMEM_LIMIT),
    )(*(x_ps + w_ps + [s_p, c_p]))

    out = out[:, :OH * Wp, :cout].reshape(N, OH, Wp, cout)[:, :, :OW, :]
    return out


def conv2d(x, p, *, stride=1, padding=0, dilation=1, relu=True,
           extra=None, mode='none'):
    """x: NHWC.  p holds a pre-transposed bf16 weight matrix plus pre-folded BN
    scale/bias.  1x1 convs (and the 7x7 stem) use the tiled GEMM; stride-1 KxK
    convs use the direct (im2col-free) conv kernel."""
    N, H, W, Cin = x.shape
    kh, kw, cout = p['kh'], p['kw'], p['cout']
    x = x.astype(jnp.bfloat16)

    if kh == 1 and kw == 1 and padding == 0:
        if stride > 1:
            x = x[:, ::stride, ::stride, :]
        OH, OW = x.shape[1], x.shape[2]
        a = x.reshape(N * OH * OW, Cin)
        if extra is not None:
            extra = extra.reshape(a.shape[0], -1)
        out = pallas_matmul_epilogue([(a, p['wt'])], p['scale'], p['bias'],
                                     relu, extra=extra, mode=mode)
        return out.reshape(N, OH, OW, cout)

    if stride == 1 and kh == kw and kh > 1:
        assert extra is None and mode == 'none'
        return conv3x3_cat([x], p, padding=padding, dilation=dilation, relu=relu)

    # fallback (stem 7x7 stride-2 only): small im2col (Cin=3) + GEMM
    OH = (H + 2 * padding - dilation * (kh - 1) - 1) // stride + 1
    OW = (W + 2 * padding - dilation * (kw - 1) - 1) // stride + 1
    xp = jnp.pad(x, ((0, 0), (padding, padding), (padding, padding), (0, 0)))
    cols = []
    for i in range(kh):
        for j in range(kw):
            h0, w0 = i * dilation, j * dilation
            cols.append(xp[:, h0:h0 + (OH - 1) * stride + 1:stride,
                           w0:w0 + (OW - 1) * stride + 1:stride, :])
    a = jnp.concatenate(cols, axis=-1).reshape(N * OH * OW, kh * kw * Cin)
    if extra is not None:
        extra = extra.reshape(a.shape[0], -1)
    out = pallas_matmul_epilogue([(a, p['wt'])], p['scale'], p['bias'], relu,
                                 extra=extra, mode=mode)
    return out.reshape(N, OH, OW, cout)


def maxpool_3x3_s2_p1_ceil(x):
    """nn.MaxPool2d(kernel_size=3, stride=2, padding=1, ceil_mode=True)."""
    # TODO(synk): still materializes the 9 strided patches in HBM (small layer).
    k, s, p = 3, 2, 1
    N, H, W, C = x.shape

    def out_dim(d):
        o = -(-(d + 2 * p - k) // s) + 1
        if (o - 1) * s >= d + p:
            o -= 1
        return o

    OH, OW = out_dim(H), out_dim(W)
    ph = max(0, (OH - 1) * s + k - p - H)
    pw = max(0, (OW - 1) * s + k - p - W)
    xp = jnp.pad(x, ((0, 0), (p, ph), (p, pw), (0, 0)),
                 constant_values=float('-inf'))

    M = N * OH * OW
    Cp = _round_up(C, 128)
    tm = min(1024, max(16, _round_up(M, 16)))
    Mp = _round_up(M, tm)

    patches = []
    for i in range(k):
        for j in range(k):
            pt = xp[:, i:i + (OH - 1) * s + 1:s, j:j + (OW - 1) * s + 1:s, :]
            patches.append(jnp.pad(pt.reshape(M, C), ((0, Mp - M), (0, Cp - C))))

    spec = pl.BlockSpec((tm, Cp), lambda i: (i, 0))
    out = pl.pallas_call(
        _maxk_kernel,
        out_shape=jax.ShapeDtypeStruct((Mp, Cp), x.dtype),
        grid_spec=pltpu.PrefetchScalarGridSpec(
            num_scalar_prefetch=0,
            grid=(Mp // tm,),
            in_specs=[spec] * 9,
            out_specs=spec,
        ),
        compiler_params=pltpu.CompilerParams(dimension_semantics=("parallel",)),
    )(*patches)
    return out[:M, :C].reshape(N, OH, OW, C)


def global_avg_pool(x):
    """Mean over the full spatial extent, batched over N in one Pallas call."""
    N, H, W, C = x.shape
    M = H * W
    Cp = _round_up(C, 128)
    tm = min(1024, _round_up(M, 16))
    Mp = _round_up(M, tm)
    xf = jnp.pad(x.reshape(N, M, C), ((0, 0), (0, Mp - M), (0, Cp - C)))
    out = pl.pallas_call(
        functools.partial(_gap_kernel, inv_count=1.0 / M),
        out_shape=jax.ShapeDtypeStruct((N, 1, Cp), jnp.float32),
        grid_spec=pltpu.PrefetchScalarGridSpec(
            num_scalar_prefetch=0,
            grid=(N, Mp // tm),
            in_specs=[pl.BlockSpec((1, tm, Cp), lambda n, m: (n, m, 0))],
            out_specs=pl.BlockSpec((1, 1, Cp), lambda n, m: (n, 0, 0)),
            scratch_shapes=[pltpu.VMEM((1, Cp), jnp.float32)],
        ),
        compiler_params=pltpu.CompilerParams(
            dimension_semantics=("parallel", "arbitrary")),
    )(xf)
    return out.reshape(N, Cp)[:, :C]


def pallas_absdiff_batched(out_nhwc, template):
    """|out - template| with the per-batch [1,C] template broadcast in-kernel,
    batched over N in a single launch."""
    N, h, w, C = out_nhwc.shape
    M = h * w
    Cp = _round_up(C, 128)
    tm = min(1024, _round_up(M, 16))
    Mp = _round_up(M, tm)
    a = jnp.pad(out_nhwc.reshape(N, M, C), ((0, 0), (0, Mp - M), (0, Cp - C)))
    t = jnp.pad(template.astype(jnp.float32).reshape(N, 1, C),
                ((0, 0), (0, 0), (0, Cp - C)))
    o = pl.pallas_call(
        _absdiff_kernel,
        out_shape=jax.ShapeDtypeStruct((N, Mp, Cp), jnp.bfloat16),
        grid_spec=pltpu.PrefetchScalarGridSpec(
            num_scalar_prefetch=0,
            grid=(N, Mp // tm),
            in_specs=[pl.BlockSpec((1, tm, Cp), lambda n, m: (n, m, 0)),
                      pl.BlockSpec((1, 1, Cp), lambda n, m: (n, 0, 0))],
            out_specs=pl.BlockSpec((1, tm, Cp), lambda n, m: (n, m, 0)),
        ),
        compiler_params=pltpu.CompilerParams(
            dimension_semantics=("parallel", "parallel")),
    )(a, t)
    return o[:, :M, :C].reshape(N, h, w, C)


def nearest_resize(x, size):
    """F.interpolate(mode='nearest') on NHWC."""
    N, H, W, C = x.shape
    OH, OW = size
    hi = np.floor(np.arange(OH) * (H / OH)).astype(np.int32)
    wi = np.floor(np.arange(OW) * (W / OW)).astype(np.int32)
    return x[:, hi, :, :][:, :, wi, :]


# ----------------------------------------------------------------------------
# Deterministic parameter construction (weights pre-transposed / pre-folded)
# ----------------------------------------------------------------------------
_PKEY = jax.random.PRNGKey(1)
_CTR = itertools.count()


def _nk():
    return jax.random.fold_in(_PKEY, next(_CTR))


def mk_conv(cin, cout, k, bias=False, bn=True):
    fan_in = cin * k * k
    std = math.sqrt(2.0 / fan_in)
    w = std * jax.random.normal(_nk(), (cout, cin, k, k), jnp.float32)
    # pre-transpose OIHW -> (KH*KW*Cin, Cout), pre-cast to bf16 (MXU operand)
    wt = jnp.transpose(w, (2, 3, 1, 0)).reshape(k * k * cin, cout).astype(jnp.bfloat16)
    scale = jnp.full((cout,), BN_FOLD_SCALE if bn else 1.0, jnp.float32)
    if bias:
        bound = 1.0 / math.sqrt(fan_in)
        b = jax.random.uniform(_nk(), (cout,), jnp.float32, -bound, bound)
        bvec = scale * b if bn else b
    else:
        bvec = jnp.zeros((cout,), jnp.float32)
    return {'wt': wt, 'scale': scale, 'bias': bvec,
            'kh': k, 'kw': k, 'cin': cin, 'cout': cout}


MEAN = np.array([0.485, 0.456, 0.406], np.float32)
STD = np.array([0.229, 0.224, 0.225], np.float32)


def build_params(no_labels):
    P = {}
    # --- ResNet_ms(Bottleneck, [3, 4, 23, 3], in_channel=3) ---
    S = {'conv1': mk_conv(3, 64, 7)}
    inplanes = 64

    def make_layer(planes, blocks, stride=1, dilation=1):
        nonlocal inplanes
        layer = []
        needs_down = (stride != 1 or inplanes != planes * 4 or dilation in (2, 4))
        blk = {'conv1': mk_conv(inplanes, planes, 1),
               'conv2': mk_conv(planes, planes, 3),
               'conv3': mk_conv(planes, planes * 4, 1),
               'stride': stride, 'dilation': dilation}
        if needs_down:
            blk['down'] = mk_conv(inplanes, planes * 4, 1)
        layer.append(blk)
        inplanes = planes * 4
        for _ in range(1, blocks):
            layer.append({'conv1': mk_conv(inplanes, planes, 1),
                          'conv2': mk_conv(planes, planes, 3),
                          'conv3': mk_conv(planes, planes * 4, 1),
                          'stride': 1, 'dilation': dilation})
        return layer

    S['layer1'] = make_layer(64, 3)
    S['layer2'] = make_layer(128, 4, stride=2)
    S['layer3'] = make_layer(256, 23, stride=1, dilation=2)
    S['layer4'] = make_layer(512, 3, stride=1, dilation=4)

    # fold the input normalization (x - mean) / std into the stem conv weights
    c1 = S['conv1']
    row_ch = np.tile(np.arange(3), 49)                 # row = (i*7+j)*3 + c
    inv_std = (1.0 / STD)[row_ch]
    mean_r = MEAN[row_ch]
    w_f = c1['wt'].astype(jnp.float32) * inv_std[:, None]
    b_shift = -jnp.sum(w_f * mean_r[:, None], axis=0)
    c1['bias'] = c1['bias'] + c1['scale'] * b_shift
    c1['wt'] = w_f.astype(jnp.bfloat16)
    P['scale'] = S

    # --- decoder / fusion heads ---
    P['conv_1x1'] = mk_conv(2048, 1024, 1, bias=True)
    P['branch'] = [mk_conv(1024, 256, 3, bias=True),
                   mk_conv(256, 512, 1, bias=True)]
    P['fuse'] = [mk_conv(1024 + 512, 512, 1, bias=True),
                 mk_conv(512, 256, 1, bias=True)]
    P['fuse2'] = [mk_conv(512, 1024, 1, bias=True),
                  mk_conv(1024, 2048, 1, bias=True)]
    P['refine'] = [mk_conv(256 + 256, 256, 3),
                   mk_conv(256, 128, 3)]
    P['predict'] = [mk_conv(128 + 64, 128, 3),
                    mk_conv(128, 128, 3),
                    mk_conv(128, no_labels, 1, bias=True, bn=False)]
    # --- ASPP (standard DeepLabV3, output_stride=16) ---
    P['aspp'] = {'aspp1': mk_conv(2048, 256, 1),
                 'aspp2': mk_conv(2048, 256, 3),
                 'aspp3': mk_conv(2048, 256, 3),
                 'aspp4': mk_conv(2048, 256, 3),
                 'gap': mk_conv(2048, 256, 1),
                 'proj': mk_conv(1280, 256, 1)}
    return P


# ----------------------------------------------------------------------------
# Model forward
# ----------------------------------------------------------------------------
def bottleneck_fwd(p, x):
    out = conv2d(x, p['conv1'], stride=p['stride'], relu=True)
    out = conv2d(out, p['conv2'], padding=p['dilation'],
                 dilation=p['dilation'], relu=True)
    if 'down' in p:
        residual = conv2d(x, p['down'], stride=p['stride'], relu=False)
    else:
        residual = x
    # residual add + ReLU fused into conv3's GEMM epilogue
    return conv2d(out, p['conv3'], relu=True, extra=residual, mode='residual')


def resnet_fwd(S, x):
    x = conv2d(x, S['conv1'], stride=2, padding=3, relu=True)
    x0_5 = x
    x = maxpool_3x3_s2_p1_ceil(x)
    for blk in S['layer1']:
        x = bottleneck_fwd(blk, x)
    x0_25 = x
    for blk in S['layer2']:
        x = bottleneck_fwd(blk, x)
    for blk in S['layer3']:
        x = bottleneck_fwd(blk, x)
    for blk in S['layer4']:
        x = bottleneck_fwd(blk, x)
    return x0_5, x0_25, x


def aspp_fwd(A, x):
    N, H, W, C = x.shape
    x1 = conv2d(x, A['aspp1'], relu=True)
    x2 = conv2d(x, A['aspp2'], padding=6, dilation=6, relu=True)
    x3 = conv2d(x, A['aspp3'], padding=12, dilation=12, relu=True)
    x4 = conv2d(x, A['aspp4'], padding=18, dilation=18, relu=True)
    gap = global_avg_pool(x).reshape(N, 1, 1, C)
    x5 = conv2d(gap, A['gap'], relu=True).reshape(N, 256)     # (N, 256)

    # 1x1 proj over cat([x1..x5]) as a split-K GEMM; the (spatially constant)
    # image-pooling branch contribution is folded into the bias (N==1) or added
    # as a fused pre-ReLU extra operand (N>1) -- no concat / broadcast in HBM.
    M = N * H * W
    wp = A['proj']['wt']
    segs = [(x1.reshape(M, 256), wp[0:256]),
            (x2.reshape(M, 256), wp[256:512]),
            (x3.reshape(M, 256), wp[512:768]),
            (x4.reshape(M, 256), wp[768:1024])]
    scale, bias = A['proj']['scale'], A['proj']['bias']
    ones = jnp.ones((256,), jnp.float32)
    zeros = jnp.zeros((256,), jnp.float32)
    contrib = pallas_matmul_epilogue([(x5, wp[1024:1280])], ones, zeros,
                                     relu=False, out_dtype=jnp.float32)  # (N, 256)
    if N == 1:
        bias = bias + scale * contrib[0]
        out = pallas_matmul_epilogue(segs, scale, bias, relu=True)
    else:
        extra = jnp.repeat(contrib * scale[None, :], H * W, axis=0)
        out = pallas_matmul_epilogue(segs, scale, bias, relu=True,
                                     extra=extra, mode='residual')
    return out.reshape(N, H, W, 256)


def fuse_branch(P, x, mask):
    out = conv2d(x, P['conv_1x1'], relu=True)                        # 1024
    m = nearest_resize(mask, out.shape[1:3])                         # [N,h,w,1]
    bf = conv2d(out, P['branch'][0], padding=1, relu=True)           # 256 (direct)
    # branch + branch*mask == branch*(1+mask), fused into branch[1]'s epilogue
    fused = conv2d(bf, P['branch'][1], relu=True,
                   extra=m.astype(jnp.float32), mode='mask')         # 512
    # fuse[0]: 1x1 over cat([out, fused]) -> split-K GEMM (no concat in HBM)
    N_, h, w, _ = out.shape
    M = N_ * h * w
    w0 = P['fuse'][0]['wt']
    o = pallas_matmul_epilogue(
        [(out.reshape(M, 1024), w0[:1024]), (fused.reshape(M, 512), w0[1024:])],
        P['fuse'][0]['scale'], P['fuse'][0]['bias'], relu=True)
    o = o.reshape(N_, h, w, 512)
    o = conv2d(o, P['fuse'][1], relu=True)                           # 256
    return o


def set_template(P, target, box):
    _, _, out = resnet_fwd(P['scale'], target)
    out = fuse_branch(P, out, box)
    return global_avg_pool(out)                                      # [N, 256] f32


def ms_deeplab_forward(P, x, mask, target, box):
    """Inputs are NCHW (PyTorch convention); output is NCHW logits (f32)."""
    to_nhwc = lambda a: jnp.transpose(a, (0, 2, 3, 1))
    x, mask, target, box = map(to_nhwc, (x, mask, target, box))

    template = set_template(P, target, box)                          # [N, 256]

    ll, low_level_feat, out = resnet_fwd(P['scale'], x)
    out = fuse_branch(P, out, mask)                                  # [N,h,w,256]

    diff = pallas_absdiff_batched(out, template)                     # [N,h,w,256]

    # fuse2[0]: 1x1 over cat([out, diff]) -> split-K GEMM
    N_, h, w, _ = out.shape
    M = N_ * h * w
    w0 = P['fuse2'][0]['wt']
    o = pallas_matmul_epilogue(
        [(out.reshape(M, 256), w0[:256]), (diff.reshape(M, 256), w0[256:])],
        P['fuse2'][0]['scale'], P['fuse2'][0]['bias'], relu=True)
    out = o.reshape(N_, h, w, 1024)
    out = conv2d(out, P['fuse2'][1], relu=True)                      # 2048
    out = aspp_fwd(P['aspp'], out)                                   # 256

    out = nearest_resize(out, low_level_feat.shape[1:3])
    out = conv3x3_cat([out, low_level_feat], P['refine'][0],
                      padding=1, relu=True)                          # 256
    out = conv2d(out, P['refine'][1], padding=1, relu=True)          # 128

    out = nearest_resize(out, ll.shape[1:3])
    out = conv3x3_cat([out, ll], P['predict'][0], padding=1, relu=True)  # 128
    out = conv2d(out, P['predict'][1], padding=1, relu=True)         # 128
    out = conv2d(out, P['predict'][2], relu=False)                   # NoLabels
    return jnp.transpose(out, (0, 3, 1, 2)).astype(jnp.float32)


# ----------------------------------------------------------------------------
if __name__ == "__main__":
    NO_LABELS = 2
    params = build_params(NO_LABELS)

    key = jax.random.PRNGKey(0)
    k1, k2, k3, k4 = jax.random.split(key, 4)
    N, H, W = 1, 32, 32
    x = jax.random.normal(k1, (N, 3, H, W), jnp.float32)
    mask = (jax.random.uniform(k2, (N, 1, H, W)) > 0.5).astype(jnp.float32)
    target = jax.random.normal(k3, (N, 3, H, W), jnp.float32)
    box = (jax.random.uniform(k4, (N, 1, H, W)) > 0.5).astype(jnp.float32)

    out = ms_deeplab_forward(params, x, mask, target, box)
    out = jax.block_until_ready(out)
    assert out.shape == (N, NO_LABELS, 16, 16), out.shape
    assert bool(jnp.all(jnp.isfinite(out)))
    print("KERNEL_OK")
</pallas_src>

<mosaic_0001>
module attributes {stable_mosaic.version = 11 : i64} {
  func.func @_gemm_kernel(%arg0: i32, %arg1: i32, %arg2: i32, %arg3: memref<128x256xbf16, #tpu.memory_space<vmem>>, %arg4: memref<256x128xbf16, #tpu.memory_space<vmem>>, %arg5: memref<1x128xf32, #tpu.memory_space<vmem>>, %arg6: memref<1x128xf32, #tpu.memory_space<vmem>>, %arg7: memref<128x128xbf16, #tpu.memory_space<vmem>>, %arg8: memref<128x128xf32, #tpu.memory_space<vmem>>) attributes {dimension_semantics = [#tpu.dimension_semantics<parallel>, #tpu.dimension_semantics<parallel>, #tpu.dimension_semantics<arbitrary>], iteration_bounds = array<i64: 2, 1, 1>, scalar_prefetch = 0 : i64, scratch_operands = 1 : i64, tpu.core_type = #tpu.core_type<tc>, window_params = [{transform_indices = @transform_0, window_bounds = array<i64: 128, 256>}, {transform_indices = @transform_1, window_bounds = array<i64: 256, 128>}, {transform_indices = @transform_2, window_bounds = array<i64: 1, 128>}, {transform_indices = @transform_3, window_bounds = array<i64: 1, 128>}, {transform_indices = @transform_4, window_bounds = array<i64: 128, 128>}]} {
    %c0_i32 = arith.constant 0 : i32
    %0 = arith.cmpi eq, %arg2, %c0_i32 : i32
    %1 = arith.extui %0 : i1 to i32
    %c0_i32_0 = arith.constant 0 : i32
    %2 = arith.cmpi ne, %1, %c0_i32_0 : i32
    scf.if %2 {
      %cst_10 = arith.constant 0.000000e+00 : f32
      %12 = vector.broadcast %cst_10 : f32 to vector<128x128xf32>
      %c0_11 = arith.constant 0 : index
      %c0_12 = arith.constant 0 : index
      %13 = vector.load %arg8[%c0_11, %c0_12] : memref<128x128xf32, #tpu.memory_space<vmem>>, vector<128x128xf32>
      tpu.vector_store %arg8[%c0_11, %c0_12], %12 {strides = array<i32>} : memref<128x128xf32, #tpu.memory_space<vmem>>, vector<128x128xf32>,
    } else {
    }
    %c0 = arith.constant 0 : index
    %c0_1 = arith.constant 0 : index
    %3 = vector.load %arg8[%c0, %c0_1] : memref<128x128xf32, #tpu.memory_space<vmem>>, vector<128x128xf32>
    %c0_2 = arith.constant 0 : index
    %c0_3 = arith.constant 0 : index
    %4 = vector.load %arg3[%c0_2, %c0_3] : memref<128x256xbf16, #tpu.memory_space<vmem>>, vector<128x256xbf16>
    %c0_4 = arith.constant 0 : index
    %c0_5 = arith.constant 0 : index
    %5 = vector.load %arg4[%c0_4, %c0_5] : memref<256x128xbf16, #tpu.memory_space<vmem>>, vector<256x128xbf16>
    %cst = arith.constant dense<0.000000e+00> : vector<128x128xf32>
    %6 = tpu.matmul %4, %5, %cst {dimension_numbers = #tpu.dot_dimension_numbers<[1], [0], [0], [1], [0, 0, 1, 1], [], []>} : vector<128x256xbf16>, vector<256x128xbf16>, vector<128x128xf32> -> vector<128x128xf32>
    %7 = arith.addf %3, %6 : vector<128x128xf32>
    %c0_6 = arith.constant 0 : index
    %c0_7 = arith.constant 0 : index
    %8 = vector.load %arg8[%c0_6, %c0_7] : memref<128x128xf32, #tpu.memory_space<vmem>>, vector<128x128xf32>
    tpu.vector_store %arg8[%c0_6, %c0_7], %7 {strides = array<i32>} : memref<128x128xf32, #tpu.memory_space<vmem>>, vector<128x128xf32>,
    %c0_i32_8 = arith.constant 0 : i32
    %9 = arith.cmpi eq, %arg2, %c0_i32_8 : i32
    %10 = arith.extui %9 : i1 to i32
    %c0_i32_9 = arith.constant 0 : i32
    %11 = arith.cmpi ne, %10, %c0_i32_9 : i32
    scf.if %11 {
      %c0_10 = arith.constant 0 : index
      %c0_11 = arith.constant 0 : index
      %12 = vector.load %arg8[%c0_10, %c0_11] : memref<128x128xf32, #tpu.memory_space<vmem>>, vector<128x128xf32>
      %c0_12 = arith.constant 0 : index
      %c0_13 = arith.constant 0 : index
      %13 = vector.load %arg5[%c0_12, %c0_13] : memref<1x128xf32, #tpu.memory_space<vmem>>, vector<1x128xf32>
      %14 = vector.broadcast %13 : vector<1x128xf32> to vector<128x128xf32>
      %15 = arith.mulf %12, %14 : vector<128x128xf32>
      %c0_14 = arith.constant 0 : index
      %c0_15 = arith.constant 0 : index
      %16 = vector.load %arg6[%c0_14, %c0_15] : memref<1x128xf32, #tpu.memory_space<vmem>>, vector<1x128xf32>
      %17 = vector.broadcast %16 : vector<1x128xf32> to vector<128x128xf32>
      %18 = arith.addf %15, %17 : vector<128x128xf32>
      %cst_16 = arith.constant 0.000000e+00 : f32
      %19 = vector.broadcast %cst_16 : f32 to vector<128x128xf32>
      %20 = arith.maximumf %18, %19 : vector<128x128xf32>
      %21 = arith.truncf %20 : vector<128x128xf32> to vector<128x128xbf16>
      %c0_17 = arith.constant 0 : index
      %c0_18 = arith.constant 0 : index
      %22 = vector.load %arg7[%c0_17, %c0_18] : memref<128x128xbf16, #tpu.memory_space<vmem>>, vector<128x128xbf16>
      tpu.vector_store %arg7[%c0_17, %c0_18], %21 {strides = array<i32>} : memref<128x128xbf16, #tpu.memory_space<vmem>>, vector<128x128xbf16>,
    } else {
    }
    return
  }
  func.func @transform_0(%arg0: i32, %arg1: i32, %arg2: i32) -> (i32, i32) {
    %c0_i32 = arith.constant 0 : i32
    %0 = arith.subi %arg2, %c0_i32 : i32
    %c0_i32_0 = arith.constant 0 : i32
    %1 = arith.maxsi %0, %c0_i32_0 : i32
    %c0_i32_1 = arith.constant 0 : i32
    %2 = arith.minsi %1, %c0_i32_1 : i32
    %c0_i32_2 = arith.constant 0 : i32
    return %arg0, %2 : i32, i32
  }
  func.func @transform_1(%arg0: i32, %arg1: i32, %arg2: i32) -> (i32, i32) {
    %c0_i32 = arith.constant 0 : i32
    %0 = arith.subi %arg2, %c0_i32 : i32
    %c0_i32_0 = arith.constant 0 : i32
    %1 = arith.maxsi %0, %c0_i32_0 : i32
    %c0_i32_1 = arith.constant 0 : i32
    %2 = arith.minsi %1, %c0_i32_1 : i32
    %c0_i32_2 = arith.constant 0 : i32
    return %2, %arg1 : i32, i32
  }
  func.func @transform_2(%arg0: i32, %arg1: i32, %arg2: i32) -> (i32, i32) {
    %c0_i32 = arith.constant 0 : i32
    %c0_i32_0 = arith.constant 0 : i32
    return %c0_i32, %arg1 : i32, i32
  }
  func.func @transform_3(%arg0: i32, %arg1: i32, %arg2: i32) -> (i32, i32) {
    %c0_i32 = arith.constant 0 : i32
    %c0_i32_0 = arith.constant 0 : i32
    return %c0_i32, %arg1 : i32, i32
  }
  func.func @transform_4(%arg0: i32, %arg1: i32, %arg2: i32) -> (i32, i32) {
    %c0_i32 = arith.constant 0 : i32
    return %arg0, %arg1 : i32, i32
  }
}

</mosaic_0001>

<llo_original>
// kernel: tpu_custom_call.1
$region0: #{tpu_custom_call.1}
  #allocation0 [shape = 'u32[]', space=smem, size = 0x4, offset = 0x4, fixed_abs, tag = 'smem constant byte address 0x4 - core index']
  #allocation1 [shape = 'u32[144,128]{1,0:T(1,128)}', space=vmem, size = 0x12000, scoped, tag = 'internal scratch']
  #allocation2 [shape = 'f32[128,128]{1,0:T(8,128)}', space=vmem, size = 0x10000, scoped, tag = 'scratch operand']
  %s0 = inlined_call_operand.hbm [shape: bf16[256,256], index: 0, kind: input, shape index: {}]
  %s1 = inlined_call_operand.hbm [shape: bf16[256,128], index: 1, kind: input, shape index: {}]
  %s2 = inlined_call_operand.vmem [shape: f32[1,128], index: 2, kind: input, shape index: {}]
  %s3 = inlined_call_operand.vmem [shape: f32[1,128], index: 3, kind: input, shape index: {}]
  %s4 = inlined_call_operand.hbm [shape: bf16[256,128], index: 4, kind: output, shape index: {}]
  %s5 = sld [smem:[#allocation0]]
  $region65: #{tpu_custom_call.1} parent=0
    _
  %s7 = ssub.s32 1, %s5
  %s8 = scalar_select 0, %s7, %s5
  $region1: #{tpu_custom_call.1} parent=0
    #allocation3 [shape = 'u8[131072]{0}', space=vmem, size = 0x20000, scoped, tag = 'input window, operand 0']
    #allocation4 [shape = 's32[2]{0}', space=sflag, size = 0x8, scoped, tag = 'scoped memory for tpu_custom_call.1']
    #allocation5 [shape = 's32[2]{0}', space=sflag, size = 0x8, scoped, tag = 'scoped memory for tpu_custom_call.1']
    #allocation6 [shape = 'u8[65536]{0}', space=vmem, size = 0x10000, scoped, tag = 'input window, operand 1, single buffered']
    #allocation7 [shape = 's32[1]{0}', space=sflag, size = 0x4, scoped, tag = 'scoped memory for tpu_custom_call.1']
    #allocation8 [shape = 'u8[65536]{0}', space=vmem, size = 0x10000, scoped, tag = 'output window, operand 0']
    %9 = vsyncpa [#allocation4], 0
    %s10 = scalar_lea.sflag [#allocation4], 1
    %11 = vsyncpa %s10, 0
    %12 = vsyncpa [#allocation7], 0
    %13 = vsyncpa [#allocation5], 0
    %s14 = scalar_lea.sflag [#allocation5], 1
    %15 = vsyncpa %s14, 0
    loop: start=0, step=1, limit=4
    $region2: #{tpu_custom_call.1} parent=1 // loop_pre_header
      _
    $region3: #{tpu_custom_call.1} parent=1 // loop_header
      %s17 = sphi 0, %s21
      %p18 = scmp.ge.s32.totalorder %s17, 4
      %s24 = sphi 0, %s43
      %s25 = sphi 0, %s39
      %s26 = sphi 0, %s35
      %s27 = sphi 0, %s24
      %s28 = sphi 0, %s25
      %s29 = sphi 0, %s26
      %s30 = sphi 0, %s27
      %s31 = sphi 0, %s28
      %s32 = sphi 0, %s29
      %s56 = sphi 0, %s58
      %s59 = sphi 0, %s56
      %s60 = sphi 0, %s59
      %s76 = sphi 0, %s60
      %s92 = sphi 0, %s94
      %s95 = sphi 0, %s92
      %s96 = sphi 0, %s95
      %s112 = sphi 0, %s96
      %s118 = sphi 0, %s120
      %s121 = sphi 0, %s118
      %s122 = sphi 0, %s121
      %s138 = sphi 0, %s122
      %s144 = sphi 0, %s146
      %s147 = sphi 0, %s144
      %s148 = sphi 0, %s147
      %s164 = sphi 0, %s148
      %s172 = sphi 0, %s174
      %s175 = sphi 0, %s172
      %s176 = sphi 0, %s175
      %s192 = sphi 0, %s176
    $region4: #{tpu_custom_call.1} parent=1 // loop_header_branch
      %20 = sbr.rel (%p18) target = $region8
    $region5: #{tpu_custom_call.1} parent=1 // loop_body
      %s22 = ssub.s32 %s17, 1
      %s23 = ssub.s32 %s17, 2
      %s33 = sadd.s32 1, %s26
      %p34 = scmp.ge.s32.totalorder %s33, 1
      %s35 = scalar_select %p34, 0, %s33
      %s36 = sadd.s32 1, %s25
      %s37 = scalar_select %p34, %s36, %s25
      %p38 = scmp.ge.s32.totalorder %s37, 1
      %s39 = scalar_select %p38, 0, %s37
      %s40 = sadd.s32 1, %s24
      %s41 = scalar_select %p38, %s40, %s24
      %p42 = scmp.ge.s32.totalorder %s41, 2
      %s43 = scalar_select %p42, 0, %s41
      %p44 = scmp.gt.s32.totalorder %s26, 0
      %s45 = scalar_select %p44, %s26, 0
      %p46 = scmp.lt.s32.totalorder %s45, 0
      %s47 = scalar_select %p46, %s45, 0
      %p48 = scmp.gt.s32.totalorder %s35, 0
      %s49 = scalar_select %p48, %s35, 0
      %p50 = scmp.lt.s32.totalorder %s49, 0
      %s51 = scalar_select %p50, %s49, 0
      %s52 = ssub.s32 %s24, %s43
      %s53 = ssub.s32 %s47, %s51
      %s54 = sor.u32 %s52, %s53
      %p55 = scmp.eq.s32.totalorder %s54, 0
      %s57 = sadd.s32 %s56, 1
      %s58 = scalar_select %p55, %s56, %s57
      %p61 = pneg %p55
      %p62 = scmp.eq.s32.totalorder %s17, 1
      %p63 = por %p61, %p62
      %p64 = scmp.ne.s32.totalorder %s56, %s59
      %p65 = scmp.eq.s32.totalorder %s17, 0
      %p66 = por %p64, %p65
      %p67 = scmp.ne.s32.totalorder %s56, %s59
      %p68 = scmp.eq.s32.totalorder %s22, 1
      %p69 = por %p67, %p68
      %p70 = scmp.ne.s32.totalorder %s59, %s60
      %p71 = scmp.eq.s32.totalorder %s22, 0
      %p72 = por %p70, %p71
      %p73 = scmp.ne.s32.totalorder %s59, %s60
      %p74 = scmp.eq.s32.totalorder %s23, 1
      %p75 = por %p73, %p74
      %p77 = scmp.ne.s32.totalorder %s60, %s76
      %p78 = scmp.eq.s32.totalorder %s23, 0
      %p79 = por %p77, %p78
      %p80 = scmp.gt.s32.totalorder %s26, 0
      %s81 = scalar_select %p80, %s26, 0
      %p82 = scmp.lt.s32.totalorder %s81, 0
      %s83 = scalar_select %p82, %s81, 0
      %p84 = scmp.gt.s32.totalorder %s35, 0
      %s85 = scalar_select %p84, %s35, 0
      %p86 = scmp.lt.s32.totalorder %s85, 0
      %s87 = scalar_select %p86, %s85, 0
      %s88 = ssub.s32 %s83, %s87
      %s89 = ssub.s32 %s25, %s39
      %s90 = sor.u32 %s88, %s89
      %p91 = scmp.eq.s32.totalorder %s90, 0
      %s93 = sadd.s32 %s92, 1
      %s94 = scalar_select %p91, %s92, %s93
      %p97 = pneg %p91
      %p98 = scmp.eq.s32.totalorder %s17, 1
      %p99 = por %p97, %p98
      %p100 = scmp.ne.s32.totalorder %s92, %s95
      %p101 = scmp.eq.s32.totalorder %s17, 0
      %p102 = por %p100, %p101
      %p103 = scmp.ne.s32.totalorder %s92, %s95
      %p104 = scmp.eq.s32.totalorder %s22, 1
      %p105 = por %p103, %p104
      %p106 = scmp.ne.s32.totalorder %s95, %s96
      %p107 = scmp.eq.s32.totalorder %s22, 0
      %p108 = por %p106, %p107
      %p109 = scmp.ne.s32.totalorder %s95, %s96
      %p110 = scmp.eq.s32.totalorder %s23, 1
      %p111 = por %p109, %p110
      %p113 = scmp.ne.s32.totalorder %s96, %s112
      %p114 = scmp.eq.s32.totalorder %s23, 0
      %p115 = por %p113, %p114
      %s116 = ssub.s32 %s25, %s39
      %p117 = scmp.eq.s32.totalorder %s116, 0
      %s119 = sadd.s32 %s118, 1
      %s120 = scalar_select %p117, %s118, %s119
      %p123 = pneg %p117
      %p124 = scmp.eq.s32.totalorder %s17, 1
      %p125 = por %p123, %p124
      %p126 = scmp.ne.s32.totalorder %s118, %s121
      %p127 = scmp.eq.s32.totalorder %s17, 0
      %p128 = por %p126, %p127
      %p129 = scmp.ne.s32.totalorder %s118, %s121
      %p130 = scmp.eq.s32.totalorder %s22, 1
      %p131 = por %p129, %p130
      %p132 = scmp.ne.s32.totalorder %s121, %s122
      %p133 = scmp.eq.s32.totalorder %s22, 0
      %p134 = por %p132, %p133
      %p135 = scmp.ne.s32.totalorder %s121, %s122
      %p136 = scmp.eq.s32.totalorder %s23, 1
      %p137 = por %p135, %p136
      %p139 = scmp.ne.s32.totalorder %s122, %s138
      %p140 = scmp.eq.s32.totalorder %s23, 0
      %p141 = por %p139, %p140
      %s142 = ssub.s32 %s25, %s39
      %p143 = scmp.eq.s32.totalorder %s142, 0
      %s145 = sadd.s32 %s144, 1
      %s146 = scalar_select %p143, %s144, %s145
      %p149 = pneg %p143
      %p150 = scmp.eq.s32.totalorder %s17, 1
      %p151 = por %p149, %p150
      %p152 = scmp.ne.s32.totalorder %s144, %s147
      %p153 = scmp.eq.s32.totalorder %s17, 0
      %p154 = por %p152, %p153
      %p155 = scmp.ne.s32.totalorder %s144, %s147
      %p156 = scmp.eq.s32.totalorder %s22, 1
      %p157 = por %p155, %p156
      %p158 = scmp.ne.s32.totalorder %s147, %s148
      %p159 = scmp.eq.s32.totalorder %s22, 0
      %p160 = por %p158, %p159
      %p161 = scmp.ne.s32.totalorder %s147, %s148
      %p162 = scmp.eq.s32.totalorder %s23, 1
      %p163 = por %p161, %p162
      %p165 = scmp.ne.s32.totalorder %s148, %s164
      %p166 = scmp.eq.s32.totalorder %s23, 0
      %p167 = por %p165, %p166
      %s168 = ssub.s32 %s24, %s43
      %s169 = ssub.s32 %s25, %s39
      %s170 = sor.u32 %s168, %s169
      %p171 = scmp.eq.s32.totalorder %s170, 0
      %s173 = sadd.s32 %s172, 1
      %s174 = scalar_select %p171, %s172, %s173
      %p177 = pneg %p171
      %p178 = scmp.eq.s32.totalorder %s17, 1
      %p179 = por %p177, %p178
      %p180 = scmp.ne.s32.totalorder %s172, %s175
      %p181 = scmp.eq.s32.totalorder %s17, 0
      %p182 = por %p180, %p181
      %p183 = scmp.ne.s32.totalorder %s172, %s175
      %p184 = scmp.eq.s32.totalorder %s22, 1
      %p185 = por %p183, %p184
      %p186 = scmp.ne.s32.totalorder %s175, %s176
      %p187 = scmp.eq.s32.totalorder %s22, 0
      %p188 = por %p186, %p187
      %p189 = scmp.ne.s32.totalorder %s175, %s176
      %p190 = scmp.eq.s32.totalorder %s23, 1
      %p191 = por %p189, %p190
      %p193 = scmp.ne.s32.totalorder %s176, %s192
      %p194 = scmp.eq.s32.totalorder %s23, 0
      %p195 = por %p193, %p194
      %p196 = scmp.le.s32.totalorder 1, %s17
      %p197 = scmp.lt.s32.totalorder %s17, 3
      %p198 = pnand %p196, %p197
      %p199 = pneg %p198
      // Predicated region
      $region9: #{tpu_custom_call.1} parent=5 // pred_check
        _
      $region10: #{tpu_custom_call.1} parent=5 // pred_check_branch
        %201 = sbr.rel (%p198) target = $region12
      $region11: #{tpu_custom_call.1} parent=5 // pred_region
        %s202 = ssub.s32 %s17, 1
        // Predicated region
        $region13: #{tpu_custom_call.1} parent=11 // pred_check
          %p203 = pneg %p108
        $region14: #{tpu_custom_call.1} parent=11 // pred_check_branch
          %205 = sbr.rel (%p203) target = $region16
        $region15: #{tpu_custom_call.1} parent=11 // pred_region
          %p206 = scmp.gt.s32.totalorder %s29, 0
          %s207 = scalar_select %p206, %s29, 0
          %p208 = scmp.lt.s32.totalorder %s207, 0
          %s209 = scalar_select %p208, %s207, 0
          %s210 = smul.u32 32, %s209
          %s212 = ssub.s32 2048, 2048
          %213 = vsyncadd [#allocation7], %s212
          %s214 = sadd.s32 %s28, %s210
          %s215 = smul.addr %s214, 64
          %s216 = scalar_lea.hbm %s1, %s215
          %s217 = sshll.u32 [#allocation6], 4
          %s218 = int_to_ptr.vmem [resolvable:$true] %s217
          %223 = dma.hbm_to_vmem [thread:$0]  %s216, 2048, %s218, [#allocation7], 64, 64, 4
        $region16: #{tpu_custom_call.1} parent=11 // pred_fallthru
          _
        // Predicated region
        $region17: #{tpu_custom_call.1} parent=11 // pred_check
          %p224 = pneg %p134
        $region18: #{tpu_custom_call.1} parent=11 // pred_check_branch
          %226 = sbr.rel (%p224) target = $region20
        $region19: #{tpu_custom_call.1} parent=11 // pred_region
          %p227 = scmp.lt.s32.totalorder %s28, 0
          %s228 = scalar_select %p227, %s28, 0
          %s229 = scalar_lea.vmem %s2, %s228
        $region20: #{tpu_custom_call.1} parent=11 // pred_fallthru
          _
        // Predicated region
        $region21: #{tpu_custom_call.1} parent=11 // pred_check
          %p230 = pneg %p160
        $region22: #{tpu_custom_call.1} parent=11 // pred_check_branch
          %232 = sbr.rel (%p230) target = $region24
        $region23: #{tpu_custom_call.1} parent=11 // pred_region
          %p233 = scmp.lt.s32.totalorder %s28, 0
          %s234 = scalar_select %p233, %s28, 0
          %s235 = scalar_lea.vmem %s3, %s234
        $region24: #{tpu_custom_call.1} parent=11 // pred_fallthru
          _
      $region12: #{tpu_custom_call.1} parent=5 // pred_fallthru
        _
      %p236 = scmp.lt.s32.totalorder %s17, 2
      // Predicated region
      $region25: #{tpu_custom_call.1} parent=5 // pred_check
        %p237 = pneg %p236
      $region26: #{tpu_custom_call.1} parent=5 // pred_check_branch
        %239 = sbr.rel (%p237) target = $region28
      $region27: #{tpu_custom_call.1} parent=5 // pred_region
        // Predicated region
        $region29: #{tpu_custom_call.1} parent=27 // pred_check
          %p240 = pneg %p66
        $region30: #{tpu_custom_call.1} parent=27 // pred_check_branch
          %242 = sbr.rel (%p240) target = $region32
        $region31: #{tpu_custom_call.1} parent=27 // pred_region
          %s243 = sand.u32 %s56, 1
          %s244 = scalar_lea.sflag [#allocation4], %s243
          %s245 = sand.u32 %s56, 1
          %s246 = smul.addr %s245, 128
          %s247 = scalar_lea.vmem [#allocation3], %s246
          %p248 = scmp.gt.s32.totalorder %s26, 0
          %s249 = scalar_select %p248, %s26, 0
          %p250 = scmp.lt.s32.totalorder %s249, 0
          %s251 = scalar_select %p250, %s249, 0
          %s252 = smul.u32 16, %s24
          %s253 = smul.u32 2, %s251
          %s255 = ssub.s32 2048, 2048
          %256 = vsyncadd %s244, %s255
          %s257 = smul.addr %s252, 2
          %s258 = sadd.s32 %s253, %s257
          %s259 = smul.addr %s258, 64
          %s260 = scalar_lea.hbm %s0, %s259
          %s261 = sshll.u32 %s247, 4
          %s262 = int_to_ptr.vmem [resolvable:$true] %s261
          %267 = dma.hbm_to_vmem [thread:$0]  %s260, 2048, %s262, %s244, 128, 128, 8
        $region32: #{tpu_custom_call.1} parent=27 // pred_fallthru
          _
      $region28: #{tpu_custom_call.1} parent=5 // pred_fallthru
        _
      %p268 = scmp.le.s32.totalorder 1, %s17
      %p269 = scmp.lt.s32.totalorder %s17, 3
      %p270 = pnand %p268, %p269
      %p271 = pneg %p270
      // Predicated region
      $region33: #{tpu_custom_call.1} parent=5 // pred_check
        _
      $region34: #{tpu_custom_call.1} parent=5 // pred_check_branch
        %273 = sbr.rel (%p270) target = $region36
      $region35: #{tpu_custom_call.1} parent=5 // pred_region
        %s274 = ssub.s32 %s17, 1
        %s275 = sand.u32 %s59, 1
        %s276 = scalar_lea.sflag [#allocation4], %s275
        %s277 = sand.u32 %s59, 1
        %s278 = smul.addr %s277, 128
        %s279 = scalar_lea.vmem [#allocation3], %s278
        // Predicated region
        $region37: #{tpu_custom_call.1} parent=35 // pred_check
          %p280 = pneg %p72
        $region38: #{tpu_custom_call.1} parent=35 // pred_check_branch
          %282 = sbr.rel (%p280) target = $region40
        $region39: #{tpu_custom_call.1} parent=35 // pred_region
          %283 = dma.done %s276, 2048
        $region40: #{tpu_custom_call.1} parent=35 // pred_fallthru
          _
        // Predicated region
        $region41: #{tpu_custom_call.1} parent=35 // pred_check
          %p284 = pneg %p108
        $region42: #{tpu_custom_call.1} parent=35 // pred_check_branch
          %286 = sbr.rel (%p284) target = $region44
        $region43: #{tpu_custom_call.1} parent=35 // pred_region
          %287 = dma.done [#allocation7], 2048
        $region44: #{tpu_custom_call.1} parent=35 // pred_fallthru
          _
        %s288 = sand.u32 %s59, 1
        %s289 = scalar_lea.sflag [#allocation4], %s288
        %s290 = sand.u32 %s59, 1
        %s291 = smul.addr %s290, 128
        %s292 = scalar_lea.vmem [#allocation3], %s291
        %p293 = pneg %p72
        %p294 = pneg %p69
        %p295 = pneg %p108
        %p296 = pneg %p105
        %p297 = scmp.lt.s32.totalorder %s28, 0
        %s298 = scalar_select %p297, %s28, 0
        %s299 = scalar_lea.vmem %s2, %s298
        %p300 = pneg %p134
        %p301 = pneg %p131
        %p302 = scmp.lt.s32.totalorder %s28, 0
        %s303 = scalar_select %p302, %s28, 0
        %s304 = scalar_lea.vmem %s3, %s303
        %p305 = pneg %p160
        %p306 = pneg %p157
        %p307 = pneg %p188
        %p308 = pneg %p185
        %s309 = sand.u32 %s175, 1
        %s310 = scalar_lea.sflag [#allocation5], %s309
        %s311 = sand.u32 %s175, 1
        %s312 = smul.addr %s311, 64
        %s313 = scalar_lea.vmem [#allocation8], %s312
        %p314 = scmp.gt.s32.totalorder %s29, 0
        %s315 = scalar_select %p314, %s29, 0
        %p316 = scmp.lt.s32.totalorder %s315, 0
        %s317 = scalar_select %p316, %s315, 0
        %s318 = smul.u32 16, %s27
        %s319 = smul.u32 2, %s317
        %p320 = scmp.gt.s32.totalorder %s29, 0
        %s321 = scalar_select %p320, %s29, 0
        %p322 = scmp.lt.s32.totalorder %s321, 0
        %s323 = scalar_select %p322, %s321, 0
        %s324 = smul.u32 32, %s323
        %p325 = scmp.lt.s32.totalorder %s28, 0
        %s326 = scalar_select %p325, %s28, 0
        %s327 = scalar_lea.vmem %s2, %s326
        %p328 = scmp.lt.s32.totalorder %s28, 0
        %s329 = scalar_select %p328, %s28, 0
        %s330 = scalar_lea.vmem %s3, %s329
        %s331 = smul.u32 16, %s27
        %p333 = scmp.eq.s32.totalorder %s29, 0
        // Predicated region
        $region45: #{tpu_custom_call.1} parent=35 // pred_check
          %p334 = pneg %p333
        $region46: #{tpu_custom_call.1} parent=35 // pred_check_branch
          %336 = sbr.rel (%p334) target = $region48
        $region47: #{tpu_custom_call.1} parent=35 // pred_region
          %337 = vst [vmem:[#allocation2] sm:$0xff] 0.0
          %338 = vst [vmem:[#allocation2 + $0x8] sm:$0xff] 0.0
          %339 = vst [vmem:[#allocation2 + $0x10] sm:$0xff] 0.0
          %340 = vst [vmem:[#allocation2 + $0x18] sm:$0xff] 0.0
          %341 = vst [vmem:[#allocation2 + $0x20] sm:$0xff] 0.0
          %342 = vst [vmem:[#allocation2 + $0x28] sm:$0xff] 0.0
          %343 = vst [vmem:[#allocation2 + $0x30] sm:$0xff] 0.0
          %344 = vst [vmem:[#allocation2 + $0x38] sm:$0xff] 0.0
          %345 = vst [vmem:[#allocation2 + $0x40] sm:$0xff] 0.0
          %346 = vst [vmem:[#allocation2 + $0x48] sm:$0xff] 0.0
          %347 = vst [vmem:[#allocation2 + $0x50] sm:$0xff] 0.0
          %348 = vst [vmem:[#allocation2 + $0x58] sm:$0xff] 0.0
          %349 = vst [vmem:[#allocation2 + $0x60] sm:$0xff] 0.0
          %350 = vst [vmem:[#allocation2 + $0x68] sm:$0xff] 0.0
          %351 = vst [vmem:[#allocation2 + $0x70] sm:$0xff] 0.0
          %352 = vst [vmem:[#allocation2 + $0x78] sm:$0xff] 0.0
        $region48: #{tpu_custom_call.1} parent=35 // pred_fallthru
          _
        %v353 = vld [vmem:[#allocation2] sm:$0xff]
        %v354 = vld [vmem:[#allocation2 + $0x8] sm:$0xff]
        %v355 = vld [vmem:[#allocation2 + $0x10] sm:$0xff]
        %v356 = vld [vmem:[#allocation2 + $0x18] sm:$0xff]
        %v357 = vld [vmem:[#allocation2 + $0x20] sm:$0xff]
        %v358 = vld [vmem:[#allocation2 + $0x28] sm:$0xff]
        %v359 = vld [vmem:[#allocation2 + $0x30] sm:$0xff]
        %v360 = vld [vmem:[#allocation2 + $0x38] sm:$0xff]
        %v361 = vld [vmem:[#allocation2 + $0x40] sm:$0xff]
        %v362 = vld [vmem:[#allocation2 + $0x48] sm:$0xff]
        %v363 = vld [vmem:[#allocation2 + $0x50] sm:$0xff]
        %v364 = vld [vmem:[#allocation2 + $0x58] sm:$0xff]
        %v365 = vld [vmem:[#allocation2 + $0x60] sm:$0xff]
        %v366 = vld [vmem:[#allocation2 + $0x68] sm:$0xff]
        %v367 = vld [vmem:[#allocation2 + $0x70] sm:$0xff]
        %v368 = vld [vmem:[#allocation2 + $0x78] sm:$0xff]
        %v369 = vld [vmem:[%s279] sm:$0xff]
        %v370 = vld [vmem:[%s279 + $0x8] sm:$0xff]
        %v371 = vld [vmem:[%s279 + $0x10] sm:$0xff]
        %v372 = vld [vmem:[%s279 + $0x18] sm:$0xff]
        %v373 = vld [vmem:[%s279 + $0x20] sm:$0xff]
        %v374 = vld [vmem:[%s279 + $0x28] sm:$0xff]
        %v375 = vld [vmem:[%s279 + $0x30] sm:$0xff]
        %v376 = vld [vmem:[%s279 + $0x38] sm:$0xff]
        %v377 = vld [vmem:[%s279 + $0x40] sm:$0xff]
        %v378 = vld [vmem:[%s279 + $0x48] sm:$0xff]
        %v379 = vld [vmem:[%s279 + $0x50] sm:$0xff]
        %v380 = vld [vmem:[%s279 + $0x58] sm:$0xff]
        %v381 = vld [vmem:[%s279 + $0x60] sm:$0xff]
        %v382 = vld [vmem:[%s279 + $0x68] sm:$0xff]
        %v383 = vld [vmem:[%s279 + $0x70] sm:$0xff]
        %v384 = vld [vmem:[%s279 + $0x78] sm:$0xff]
        %v385 = vld [vmem:[#allocation6] sm:$0xf]
        %v386 = vld [vmem:[#allocation6 + $0x4] sm:$0xf]
        %v387 = vld [vmem:[#allocation6 + $0x8] sm:$0xf]
        %v388 = vld [vmem:[#allocation6 + $0xc] sm:$0xf]
        %v389 = vld [vmem:[#allocation6 + $0x10] sm:$0xf]
        %v390 = vld [vmem:[#allocation6 + $0x14] sm:$0xf]
        %v391 = vld [vmem:[#allocation6 + $0x18] sm:$0xf]
        %v392 = vld [vmem:[#allocation6 + $0x1c] sm:$0xf]
        %v393 = vld [vmem:[#allocation6 + $0x20] sm:$0xf]
        %v394 = vld [vmem:[#allocation6 + $0x24] sm:$0xf]
        %v395 = vld [vmem:[#allocation6 + $0x28] sm:$0xf]
        %v396 = vld [vmem:[#allocation6 + $0x2c] sm:$0xf]
        %v397 = vld [vmem:[#allocation6 + $0x30] sm:$0xf]
        %v398 = vld [vmem:[#allocation6 + $0x34] sm:$0xf]
        %v399 = vld [vmem:[#allocation6 + $0x38] sm:$0xf]
        %v400 = vld [vmem:[#allocation6 + $0x3c] sm:$0xf]
        %v401 = vld [vmem:[#allocation6 + $0x40] sm:$0xf]
        %v402 = vld [vmem:[#allocation6 + $0x44] sm:$0xf]
        %v403 = vld [vmem:[#allocation6 + $0x48] sm:$0xf]
        %v404 = vld [vmem:[#allocation6 + $0x4c] sm:$0xf]
        %v405 = vld [vmem:[#allocation6 + $0x50] sm:$0xf]
        %v406 = vld [vmem:[#allocation6 + $0x54] sm:$0xf]
        %v407 = vld [vmem:[#allocation6 + $0x58] sm:$0xf]
        %v408 = vld [vmem:[#allocation6 + $0x5c] sm:$0xf]
        %v409 = vld [vmem:[#allocation6 + $0x60] sm:$0xf]
        %v410 = vld [vmem:[#allocation6 + $0x64] sm:$0xf]
        %v411 = vld [vmem:[#allocation6 + $0x68] sm:$0xf]
        %v412 = vld [vmem:[#allocation6 + $0x6c] sm:$0xf]
        %v413 = vld [vmem:[#allocation6 + $0x70] sm:$0xf]
        %v414 = vld [vmem:[#allocation6 + $0x74] sm:$0xf]
        %v415 = vld [vmem:[#allocation6 + $0x78] sm:$0xf]
        %v416 = vld [vmem:[#allocation6 + $0x7c] sm:$0xf]
        %v433 = vunpack.c.l.b16 %v369
        %v434 = vunpack.c.h.b16 %v369
        %v435 = vunpack.c.l.b16 %v370
        %v436 = vunpack.c.h.b16 %v370
        %v437 = vunpack.c.l.b16 %v371
        %v438 = vunpack.c.h.b16 %v371
        %v439 = vunpack.c.l.b16 %v372
        %v440 = vunpack.c.h.b16 %v372
        %v441 = vunpack.c.l.b16 %v373
        %v442 = vunpack.c.h.b16 %v373
        %v443 = vunpack.c.l.b16 %v374
        %v444 = vunpack.c.h.b16 %v374
        %v445 = vunpack.c.l.b16 %v375
        %v446 = vunpack.c.h.b16 %v375
        %v447 = vunpack.c.l.b16 %v376
        %v448 = vunpack.c.h.b16 %v376
        %v449 = vunpack.c.l.b16 %v377
        %v450 = vunpack.c.h.b16 %v377
        %v451 = vunpack.c.l.b16 %v378
        %v452 = vunpack.c.h.b16 %v378
        %v453 = vunpack.c.l.b16 %v379
        %v454 = vunpack.c.h.b16 %v379
        %v455 = vunpack.c.l.b16 %v380
        %v456 = vunpack.c.h.b16 %v380
        %v457 = vunpack.c.l.b16 %v381
        %v458 = vunpack.c.h.b16 %v381
        %v459 = vunpack.c.l.b16 %v382
        %v460 = vunpack.c.h.b16 %v382
        %v461 = vunpack.c.l.b16 %v383
        %v462 = vunpack.c.h.b16 %v383
        %v463 = vunpack.c.l.b16 %v384
        %v464 = vunpack.c.h.b16 %v384
        %v465 = vpack.c.b16 %v435, %v433
        %v466 = vpack.c.b16 %v436, %v434
        %v467 = vpack.c.b16 %v439, %v437
        %v468 = vpack.c.b16 %v440, %v438
        %v469 = vpack.c.b16 %v443, %v441
        %v470 = vpack.c.b16 %v444, %v442
        %v471 = vpack.c.b16 %v447, %v445
        %v472 = vpack.c.b16 %v448, %v446
        %v473 = vpack.c.b16 %v451, %v449
        %v474 = vpack.c.b16 %v452, %v450
        %v475 = vpack.c.b16 %v455, %v453
        %v476 = vpack.c.b16 %v456, %v454
        %v477 = vpack.c.b16 %v459, %v457
        %v478 = vpack.c.b16 %v460, %v458
        %v479 = vpack.c.b16 %v463, %v461
        %v480 = vpack.c.b16 %v464, %v462
        %v529 = vunpack.c.l.b16 %v385
        %v530 = vunpack.c.l.b16 %v386
        %v531 = vunpack.c.l.b16 %v387
        %v532 = vunpack.c.l.b16 %v388
        %v533 = vunpack.c.l.b16 %v389
        %v534 = vunpack.c.l.b16 %v390
        %v535 = vunpack.c.l.b16 %v391
        %v536 = vunpack.c.l.b16 %v392
        %v537 = vunpack.c.l.b16 %v393
        %v538 = vunpack.c.l.b16 %v394
        %v539 = vunpack.c.l.b16 %v395
        %v540 = vunpack.c.l.b16 %v396
        %v541 = vunpack.c.l.b16 %v397
        %v542 = vunpack.c.l.b16 %v398
        %v543 = vunpack.c.l.b16 %v399
        %v544 = vunpack.c.l.b16 %v400
        %v545 = vunpack.c.l.b16 %v401
        %v546 = vunpack.c.l.b16 %v402
        %v547 = vunpack.c.l.b16 %v403
        %v548 = vunpack.c.l.b16 %v404
        %v549 = vunpack.c.l.b16 %v405
        %v550 = vunpack.c.l.b16 %v406
        %v551 = vunpack.c.l.b16 %v407
        %v552 = vunpack.c.l.b16 %v408
        %v553 = vunpack.c.l.b16 %v409
        %v554 = vunpack.c.l.b16 %v410
        %v555 = vunpack.c.l.b16 %v411
        %v556 = vunpack.c.l.b16 %v412
        %v557 = vunpack.c.l.b16 %v413
        %v558 = vunpack.c.l.b16 %v414
        %v559 = vunpack.c.l.b16 %v415
        %v560 = vunpack.c.l.b16 %v416
        %v561 = vpack.c.b16 %v530, %v529
        %v562 = vpack.c.b16 %v532, %v531
        %v563 = vpack.c.b16 %v534, %v533
        %v564 = vpack.c.b16 %v536, %v535
        %v565 = vpack.c.b16 %v538, %v537
        %v566 = vpack.c.b16 %v540, %v539
        %v567 = vpack.c.b16 %v542, %v541
        %v568 = vpack.c.b16 %v544, %v543
        %v569 = vpack.c.b16 %v546, %v545
        %v570 = vpack.c.b16 %v548, %v547
        %v571 = vpack.c.b16 %v550, %v549
        %v572 = vpack.c.b16 %v552, %v551
        %v573 = vpack.c.b16 %v554, %v553
        %v574 = vpack.c.b16 %v556, %v555
        %v575 = vpack.c.b16 %v558, %v557
        %v576 = vpack.c.b16 %v560, %v559
        %593 = vmatprep.subr.bf16.mxu0 0
        %594 = vmatpush1.bf16.msra.mxu0 %v561
        %595 = vmatprep.subr.bf16.mxu0 0
        %596 = vmatpush1.bf16.msra.mxu0 %v562
        %597 = vmatprep.subr.bf16.mxu0 0
        %598 = vmatpush1.bf16.msra.mxu0 %v563
        %599 = vmatprep.subr.bf16.mxu0 0
        %600 = vmatpush1.bf16.msra.mxu0 %v564
        %601 = vmatprep.subr.bf16.mxu0 0
        %602 = vmatpush1.bf16.msra.mxu0 %v565
        %603 = vmatprep.subr.bf16.mxu0 0
        %604 = vmatpush1.bf16.msra.mxu0 %v566
        %605 = vmatprep.subr.bf16.mxu0 0
        %606 = vmatpush1.bf16.msra.mxu0 %v567
        %607 = vmatprep.subr.bf16.mxu0 0
        %608 = vmatpush1.bf16.msra.mxu0 %v568
        %609 = vmatprep.subr.bf16.mxu0 0
        %610 = vmatpush1.bf16.msra.mxu0 %v569
        %611 = vmatprep.subr.bf16.mxu0 0
        %612 = vmatpush1.bf16.msra.mxu0 %v570
        %613 = vmatprep.subr.bf16.mxu0 0
        %614 = vmatpush1.bf16.msra.mxu0 %v571
        %615 = vmatprep.subr.bf16.mxu0 0
        %616 = vmatpush1.bf16.msra.mxu0 %v572
        %617 = vmatprep.subr.bf16.mxu0 0
        %618 = vmatpush1.bf16.msra.mxu0 %v573
        %619 = vmatprep.subr.bf16.mxu0 0
        %620 = vmatpush1.bf16.msra.mxu0 %v574
        %621 = vmatprep.subr.bf16.mxu0 0
        %622 = vmatpush1.bf16.msra.mxu0 %v575
        %623 = vmatprep.subr.bf16.mxu0 0
        %624 = vmatpush1.bf16.msra.mxu0 %v576
        %625 = vmatprep.mubr.bf16.mxu0 %v466
        %626 = vmatmul.mubr.bf16.gmra.mrb[0].mxu0 %v465
        %v627 = vpop.f32.mrb[0].mxu0
        %v628 = vadd.f32 0.0, %v627
        %v629 = vpop.f32.mrb[0].mxu0
        %v630 = vpop.f32.mrb[0].mxu0
        %v631 = vadd.f32 0.0, %v630
        %v632 = vpop.f32.mrb[0].mxu0
        %633 = vmatprep.mubr.bf16.mxu0 %v468
        %634 = vmatmul.mubr.bf16.gmra.mrb[0].mxu0 %v467
        %v635 = vpop.f32.mrb[0].mxu0
        %v636 = vadd.f32 0.0, %v635
        %v637 = vpop.f32.mrb[0].mxu0
        %v638 = vpop.f32.mrb[0].mxu0
        %v639 = vadd.f32 0.0, %v638
        %v640 = vpop.f32.mrb[0].mxu0
        %641 = vmatprep.mubr.bf16.mxu0 %v470
        %642 = vmatmul.mubr.bf16.gmra.mrb[0].mxu0 %v469
        %v643 = vpop.f32.mrb[0].mxu0
        %v644 = vadd.f32 0.0, %v643
        %v645 = vpop.f32.mrb[0].mxu0
        %v646 = vpop.f32.mrb[0].mxu0
        %v647 = vadd.f32 0.0, %v646
        %v648 = vpop.f32.mrb[0].mxu0
        %649 = vmatprep.mubr.bf16.mxu0 %v472
        %650 = vmatmul.mubr.bf16.gmra.mrb[0].mxu0 %v471
        %v651 = vpop.f32.mrb[0].mxu0
        %v652 = vadd.f32 0.0, %v651
        %v653 = vpop.f32.mrb[0].mxu0
        %v654 = vpop.f32.mrb[0].mxu0
        %v655 = vadd.f32 0.0, %v654
        %v656 = vpop.f32.mrb[0].mxu0
        %657 = vmatprep.mubr.bf16.mxu0 %v474
        %658 = vmatmul.mubr.bf16.gmra.mrb[0].mxu0 %v473
        %v659 = vpop.f32.mrb[0].mxu0
        %v660 = vadd.f32 0.0, %v659
        %v661 = vpop.f32.mrb[0].mxu0
        %v662 = vpop.f32.mrb[0].mxu0
        %v663 = vadd.f32 0.0, %v662
        %v664 = vpop.f32.mrb[0].mxu0
        %665 = vmatprep.mubr.bf16.mxu0 %v476
        %666 = vmatmul.mubr.bf16.gmra.mrb[0].mxu0 %v475
        %v667 = vpop.f32.mrb[0].mxu0
        %v668 = vadd.f32 0.0, %v667
        %v669 = vpop.f32.mrb[0].mxu0
        %v670 = vpop.f32.mrb[0].mxu0
        %v671 = vadd.f32 0.0, %v670
        %v672 = vpop.f32.mrb[0].mxu0
        %673 = vmatprep.mubr.bf16.mxu0 %v478
        %674 = vmatmul.mubr.bf16.gmra.mrb[0].mxu0 %v477
        %v675 = vpop.f32.mrb[0].mxu0
        %v676 = vadd.f32 0.0, %v675
        %v677 = vpop.f32.mrb[0].mxu0
        %v678 = vpop.f32.mrb[0].mxu0
        %v679 = vadd.f32 0.0, %v678
        %v680 = vpop.f32.mrb[0].mxu0
        %681 = vmatprep.mubr.bf16.mxu0 %v480
        %682 = vmatmul.mubr.bf16.gmra.mrb[0].mxu0 %v479
        %v683 = vpop.f32.mrb[0].mxu0
        %v684 = vadd.f32 0.0, %v683
        %v685 = vpop.f32.mrb[0].mxu0
        %v686 = vpop.f32.mrb[0].mxu0
        %v687 = vadd.f32 0.0, %v686
        %v688 = vpop.f32.mrb[0].mxu0
        %689 = vdwg.mxu0
        %v690 = vadd.f32 %v353, %v628
        %v691 = vadd.f32 %v354, %v631
        %v692 = vadd.f32 %v355, %v636
        %v693 = vadd.f32 %v356, %v639
        %v694 = vadd.f32 %v357, %v644
        %v695 = vadd.f32 %v358, %v647
        %v696 = vadd.f32 %v359, %v652
        %v697 = vadd.f32 %v360, %v655
        %v698 = vadd.f32 %v361, %v660
        %v699 = vadd.f32 %v362, %v663
        %v700 = vadd.f32 %v363, %v668
        %v701 = vadd.f32 %v364, %v671
        %v702 = vadd.f32 %v365, %v676
        %v703 = vadd.f32 %v366, %v679
        %v704 = vadd.f32 %v367, %v684
        %v705 = vadd.f32 %v368, %v687
        %706 = vst [vmem:[#allocation2] sm:$0xff] %v690
        %707 = vst [vmem:[#allocation2 + $0x8] sm:$0xff] %v691
        %708 = vst [vmem:[#allocation2 + $0x10] sm:$0xff] %v692
        %709 = vst [vmem:[#allocation2 + $0x18] sm:$0xff] %v693
        %710 = vst [vmem:[#allocation2 + $0x20] sm:$0xff] %v694
        %711 = vst [vmem:[#allocation2 + $0x28] sm:$0xff] %v695
        %712 = vst [vmem:[#allocation2 + $0x30] sm:$0xff] %v696
        %713 = vst [vmem:[#allocation2 + $0x38] sm:$0xff] %v697
        %714 = vst [vmem:[#allocation2 + $0x40] sm:$0xff] %v698
        %715 = vst [vmem:[#allocation2 + $0x48] sm:$0xff] %v699
        %716 = vst [vmem:[#allocation2 + $0x50] sm:$0xff] %v700
        %717 = vst [vmem:[#allocation2 + $0x58] sm:$0xff] %v701
        %718 = vst [vmem:[#allocation2 + $0x60] sm:$0xff] %v702
        %719 = vst [vmem:[#allocation2 + $0x68] sm:$0xff] %v703
        %720 = vst [vmem:[#allocation2 + $0x70] sm:$0xff] %v704
        %721 = vst [vmem:[#allocation2 + $0x78] sm:$0xff] %v705
        // Predicated region
        $region49: #{tpu_custom_call.1} parent=35 // pred_check
          %p722 = pneg %p333
        $region50: #{tpu_custom_call.1} parent=35 // pred_check_branch
          %724 = sbr.rel (%p722) target = $region52
        $region51: #{tpu_custom_call.1} parent=35 // pred_region
          %v725 = vld [vmem:[#allocation2] sm:$0xff]
          %v726 = vld [vmem:[#allocation2 + $0x8] sm:$0xff]
          %v727 = vld [vmem:[#allocation2 + $0x10] sm:$0xff]
          %v728 = vld [vmem:[#allocation2 + $0x18] sm:$0xff]
          %v729 = vld [vmem:[#allocation2 + $0x20] sm:$0xff]
          %v730 = vld [vmem:[#allocation2 + $0x28] sm:$0xff]
          %v731 = vld [vmem:[#allocation2 + $0x30] sm:$0xff]
          %v732 = vld [vmem:[#allocation2 + $0x38] sm:$0xff]
          %v733 = vld [vmem:[#allocation2 + $0x40] sm:$0xff]
          %v734 = vld [vmem:[#allocation2 + $0x48] sm:$0xff]
          %v735 = vld [vmem:[#allocation2 + $0x50] sm:$0xff]
          %v736 = vld [vmem:[#allocation2 + $0x58] sm:$0xff]
          %v737 = vld [vmem:[#allocation2 + $0x60] sm:$0xff]
          %v738 = vld [vmem:[#allocation2 + $0x68] sm:$0xff]
          %v739 = vld [vmem:[#allocation2 + $0x70] sm:$0xff]
          %v740 = vld [vmem:[#allocation2 + $0x78] sm:$0xff]
          %v741 = vld [vmem:[%s327] sm:$0x1]
          %v743 = vlaneseq
          %v744 = vshrl.u32 %v743, 7
          %v745 = vsub.s32 0, %v744
          %v746 = vrot.slane %v741, %v745
          %v748 = vmul.f32 %v725, %v746
          %v749 = vmul.f32 %v726, %v746
          %v750 = vmul.f32 %v727, %v746
          %v751 = vmul.f32 %v728, %v746
          %v752 = vmul.f32 %v729, %v746
          %v753 = vmul.f32 %v730, %v746
          %v754 = vmul.f32 %v731, %v746
          %v755 = vmul.f32 %v732, %v746
          %v756 = vmul.f32 %v733, %v746
          %v757 = vmul.f32 %v734, %v746
          %v758 = vmul.f32 %v735, %v746
          %v759 = vmul.f32 %v736, %v746
          %v760 = vmul.f32 %v737, %v746
          %v761 = vmul.f32 %v738, %v746
          %v762 = vmul.f32 %v739, %v746
          %v763 = vmul.f32 %v740, %v746
          %v764 = vld [vmem:[%s330] sm:$0x1]
          %v766 = vlaneseq
          %v767 = vshrl.u32 %v766, 7
          %v768 = vsub.s32 0, %v767
          %v769 = vrot.slane %v764, %v768
          %v771 = vadd.f32 %v748, %v769
          %v772 = vadd.f32 %v749, %v769
          %v773 = vadd.f32 %v750, %v769
          %v774 = vadd.f32 %v751, %v769
          %v775 = vadd.f32 %v752, %v769
          %v776 = vadd.f32 %v753, %v769
          %v777 = vadd.f32 %v754, %v769
          %v778 = vadd.f32 %v755, %v769
          %v779 = vadd.f32 %v756, %v769
          %v780 = vadd.f32 %v757, %v769
          %v781 = vadd.f32 %v758, %v769
          %v782 = vadd.f32 %v759, %v769
          %v783 = vadd.f32 %v760, %v769
          %v784 = vadd.f32 %v761, %v769
          %v785 = vadd.f32 %v762, %v769
          %v786 = vadd.f32 %v763, %v769
          %v787 = vmax.f32 %v771, 0.0
          %v788 = vmax.f32 %v772, 0.0
          %v789 = vmax.f32 %v773, 0.0
          %v790 = vmax.f32 %v774, 0.0
          %v791 = vmax.f32 %v775, 0.0
          %v792 = vmax.f32 %v776, 0.0
          %v793 = vmax.f32 %v777, 0.0
          %v794 = vmax.f32 %v778, 0.0
          %v795 = vmax.f32 %v779, 0.0
          %v796 = vmax.f32 %v780, 0.0
          %v797 = vmax.f32 %v781, 0.0
          %v798 = vmax.f32 %v782, 0.0
          %v799 = vmax.f32 %v783, 0.0
          %v800 = vmax.f32 %v784, 0.0
          %v801 = vmax.f32 %v785, 0.0
          %v802 = vmax.f32 %v786, 0.0
          %v803 = vpack.c.bf16 %v788, %v787
          %v804 = vpack.c.bf16 %v790, %v789
          %v805 = vpack.c.bf16 %v792, %v791
          %v806 = vpack.c.bf16 %v794, %v793
          %v807 = vpack.c.bf16 %v796, %v795
          %v808 = vpack.c.bf16 %v798, %v797
          %v809 = vpack.c.bf16 %v800, %v799
          %v810 = vpack.c.bf16 %v802, %v801
          %v819 = vunpack.c.l.b16 %v803
          %v820 = vunpack.c.h.b16 %v803
          %v821 = vunpack.c.l.b16 %v804
          %v822 = vunpack.c.h.b16 %v804
          %v823 = vunpack.c.l.b16 %v805
          %v824 = vunpack.c.h.b16 %v805
          %v825 = vunpack.c.l.b16 %v806
          %v826 = vunpack.c.h.b16 %v806
          %v827 = vunpack.c.l.b16 %v807
          %v828 = vunpack.c.h.b16 %v807
          %v829 = vunpack.c.l.b16 %v808
          %v830 = vunpack.c.h.b16 %v808
          %v831 = vunpack.c.l.b16 %v809
          %v832 = vunpack.c.h.b16 %v809
          %v833 = vunpack.c.l.b16 %v810
          %v834 = vunpack.c.h.b16 %v810
          %v835 = vpack.c.b16 %v819, %v819
          %v836 = vpack.c.b16 %v820, %v820
          %v837 = vpack.c.b16 %v821, %v821
          %v838 = vpack.c.b16 %v822, %v822
          %v839 = vpack.c.b16 %v823, %v823
          %v840 = vpack.c.b16 %v824, %v824
          %v841 = vpack.c.b16 %v825, %v825
          %v842 = vpack.c.b16 %v826, %v826
          %v843 = vpack.c.b16 %v827, %v827
          %v844 = vpack.c.b16 %v828, %v828
          %v845 = vpack.c.b16 %v829, %v829
          %v846 = vpack.c.b16 %v830, %v830
          %v847 = vpack.c.b16 %v831, %v831
          %v848 = vpack.c.b16 %v832, %v832
          %v849 = vpack.c.b16 %v833, %v833
          %v850 = vpack.c.b16 %v834, %v834
          %867 = vst [vmem:[%s313] sm:$0xf] %v835
          %868 = vst [vmem:[%s313 + $0x4] sm:$0xf] %v836
          %869 = vst [vmem:[%s313 + $0x8] sm:$0xf] %v837
          %870 = vst [vmem:[%s313 + $0xc] sm:$0xf] %v838
          %871 = vst [vmem:[%s313 + $0x10] sm:$0xf] %v839
          %872 = vst [vmem:[%s313 + $0x14] sm:$0xf] %v840
          %873 = vst [vmem:[%s313 + $0x18] sm:$0xf] %v841
          %874 = vst [vmem:[%s313 + $0x1c] sm:$0xf] %v842
          %875 = vst [vmem:[%s313 + $0x20] sm:$0xf] %v843
          %876 = vst [vmem:[%s313 + $0x24] sm:$0xf] %v844
          %877 = vst [vmem:[%s313 + $0x28] sm:$0xf] %v845
          %878 = vst [vmem:[%s313 + $0x2c] sm:$0xf] %v846
          %879 = vst [vmem:[%s313 + $0x30] sm:$0xf] %v847
          %880 = vst [vmem:[%s313 + $0x34] sm:$0xf] %v848
          %881 = vst [vmem:[%s313 + $0x38] sm:$0xf] %v849
          %882 = vst [vmem:[%s313 + $0x3c] sm:$0xf] %v850
        $region52: #{tpu_custom_call.1} parent=35 // pred_fallthru
          _
        %s883 = sand.u32 %s175, 1
        %s884 = scalar_lea.sflag [#allocation5], %s883
        %s885 = sand.u32 %s175, 1
        %s886 = smul.addr %s885, 64
        %s887 = scalar_lea.vmem [#allocation8], %s886
        // Predicated region
        $region53: #{tpu_custom_call.1} parent=35 // pred_check
          %p888 = pneg %p185
        $region54: #{tpu_custom_call.1} parent=35 // pred_check_branch
          %890 = sbr.rel (%p888) target = $region56
        $region55: #{tpu_custom_call.1} parent=35 // pred_region
          %s891 = smul.u32 16, %s27
          %s893 = ssub.s32 1024, 1024
          %894 = vsyncadd %s884, %s893
          %s895 = sadd.s32 %s28, %s891
          %s896 = smul.addr %s895, 64
          %s897 = scalar_lea.hbm %s4, %s896
          %s898 = sshll.u32 %s887, 4
          %s899 = int_to_ptr.vmem [resolvable:$true] %s898
          %904 = dma.vmem_to_hbm [thread:$0]  %s899, 1024, %s897, %s884, 64, 64, 4
        $region56: #{tpu_custom_call.1} parent=35 // pred_fallthru
          _
      $region36: #{tpu_custom_call.1} parent=5 // pred_fallthru
        _
      %p905 = scmp.le.s32.totalorder 2, %s17
      // Predicated region
      $region57: #{tpu_custom_call.1} parent=5 // pred_check
        %p906 = pneg %p905
      $region58: #{tpu_custom_call.1} parent=5 // pred_check_branch
        %908 = sbr.rel (%p906) target = $region60
      $region59: #{tpu_custom_call.1} parent=5 // pred_region
        %s909 = ssub.s32 %s17, 2
        // Predicated region
        $region61: #{tpu_custom_call.1} parent=59 // pred_check
          %p910 = pneg %p191
        $region62: #{tpu_custom_call.1} parent=59 // pred_check_branch
          %912 = sbr.rel (%p910) target = $region64
        $region63: #{tpu_custom_call.1} parent=59 // pred_region
          %s913 = sand.u32 %s176, 1
          %s914 = scalar_lea.sflag [#allocation5], %s913
          %s915 = sand.u32 %s176, 1
          %s916 = smul.addr %s915, 64
          %s917 = scalar_lea.vmem [#allocation8], %s916
          %918 = dma.done %s914, 1024
        $region64: #{tpu_custom_call.1} parent=59 // pred_fallthru
          _
      $region60: #{tpu_custom_call.1} parent=5 // pred_fallthru
        _
    $region6: #{tpu_custom_call.1} parent=1 // loop_footer
      %s21 = sadd.s32 1, %s17
    $region7: #{tpu_custom_call.1} parent=1 // loop_footer_branch
      %16 = sbr.rel target = $region3
    $region8: #{tpu_custom_call.1} parent=1 // loop_exit
      _
    %919 = vsyncpa [#allocation4], 1
    %s920 = scalar_lea.sflag [#allocation4], 1
    %921 = vsyncpa %s920, 1
    %922 = vsyncpa [#allocation7], 1
    %923 = vsyncpa [#allocation5], 1
    %s924 = scalar_lea.sflag [#allocation5], 1
    %925 = vsyncpa %s924, 1

</llo_original>
